<compile_context>
chip_gen: v6e
topology: v6e:2x2x1
jax: 0.10.0
libtpu: 0.0.40
codegen_flags: <defaults>
</compile_context>

<pallas_src>
from functools import partial

import jax
import jax.numpy as jnp
from jax.experimental import pallas as pl
from jax.experimental.pallas import tpu as pltpu

# ---------------------------------------------------------------------------
# Deterministic "LossConfig" (synthetic, Pixel2Mesh-style weights)
# ---------------------------------------------------------------------------
LOSS_CONFIG = dict(
    normal_weights=1.6e-4,
    edge_weights=0.3,
    laplace_weights=0.5,
    move_weights=0.1,            # computed in torch but never added to loss
    constant_weights=1.0,
    chamfer_weights=(1.0, 1.0, 1.0),
    chamfer_opposite_weights=0.55,
)
LAP_CONST = (0.2, 1.0, 1.0)      # lap_const in forward(); block_idx == 2 is used


def _round_up(x, m):
    return ((x + m - 1) // m) * m


# ---------------------------------------------------------------------------
# Pallas kernel: tiled chamfer + first-hit nearest gt-normal selection
# ---------------------------------------------------------------------------
def _chamfer_nn_kernel(gt_ref, predt_ref, gtnt_ref, sums_ref, nnt_ref,
                       dmin_ref, *, tg, ng_valid, np_valid):
    g = pl.program_id(1)
    n_g = pl.num_programs(1)

    gt = gt_ref[0]        # (Tg, 3)   gt points tile (rows of the distance tile)
    predt = predt_ref[0]  # (3, Npp)  pred points, coords on sublanes (resident)
    gtnt = gtnt_ref[0]    # (3, Tg)   gt normals tile, transposed (lane-dense)

    npp = predt.shape[1]
    lane = jax.lax.broadcasted_iota(jnp.int32, (1, 128), 1)

    @pl.when(g == 0)
    def _():
        dmin_ref[...] = jnp.full((1, npp), jnp.inf, jnp.float32)
        nnt_ref[...] = jnp.zeros((1, 3, npp), jnp.float32)
        sums_ref[...] = jnp.zeros((1, 1, 128), jnp.float32)

    # Squared distances, coordinate-wise on the VPU (no ||a||^2+||b||^2-2ab
    # expansion -> no cancellation, no K=3 MXU matmul).  `d` is a single SSA
    # value reused for both min-reductions and the argmin compare below.
    dx = gt[:, 0:1] - predt[0:1, :]
    dy = gt[:, 1:2] - predt[1:2, :]
    dz = gt[:, 2:3] - predt[2:3, :]
    d = dx * dx + dy * dy + dz * dz                          # (Tg, Npp)

    rid = jax.lax.broadcasted_iota(jnp.int32, d.shape, 0)    # local gt row ids

    # ---- dist1: per-gt-row min over pred, summed over the VALID gt rows ----
    row_min = jnp.min(d, axis=1, keepdims=True)              # (Tg, 1)
    gt_row = rid[:, 0:1] + g * tg                            # global gt row ids
    s1 = jnp.sum(jnp.where(gt_row < ng_valid, row_min, 0.0),
                 axis=0, keepdims=True)                       # (1, 1)
    sums_ref[0] = sums_ref[0] + jnp.where(lane == 0, s1, 0.0)

    # ---- dist2 running min + first-hit argmin one-hot (within tile) --------
    col_min = jnp.min(d, axis=0, keepdims=True)               # (1, Npp)
    amin = jnp.min(jnp.where(d <= col_min, rid, tg), axis=0, keepdims=True)
    onehot = (rid == amin).astype(jnp.float32)                 # (Tg, Npp), unique/col
    # nearest gt normal candidate from this tile, lane-dense (3, Npp); the
    # contraction dim Tg is real MXU work, skinny only on the 3-row LHS.
    nn_tile = jnp.dot(gtnt, onehot, preferred_element_type=jnp.float32)

    # cross-tile merge: strict '<' so an earlier tile (smaller global index)
    # wins ties, matching the reference chamfer's first-hit argmin.
    upd = col_min < dmin_ref[...]                              # (1, Npp)
    dmin_ref[...] = jnp.where(upd, col_min, dmin_ref[...])
    nnt_ref[0] = jnp.where(upd, nn_tile, nnt_ref[0])

    # ---- epilogue on the last gt tile: finish dist2 over VALID pred cols ---
    @pl.when(g == n_g - 1)
    def _():
        col = jax.lax.broadcasted_iota(jnp.int32, (1, npp), 1)
        s2 = jnp.sum(jnp.where(col < np_valid, dmin_ref[...], 0.0),
                     axis=1, keepdims=True)                    # (1, 1)
        sums_ref[0] = sums_ref[0] + jnp.where(lane == 1, s2, 0.0)


def chamfer_with_nearest_normals(gt, pred, gt_normal, *, gt_tile=None,
                                 tile_budget_bytes=24 * 1024 * 1024):
    """Per-batch [sum dist1, sum dist2] and the nearest gt normal per pred point.

    dist1[i] = min_j ||gt_i - pred_j||^2   (summed over valid gt points)
    dist2[j] = min_i ||gt_i - pred_j||^2   (summed over valid pred points)
    nn[j]    = gt_normal[argmin_i ||gt_i - pred_j||^2]   (first-hit argmin)
    """
    gt = gt.astype(jnp.float32)
    pred = pred.astype(jnp.float32)
    gt_normal = gt_normal.astype(jnp.float32)

    B, ng, _ = gt.shape
    npts = pred.shape[1]

    # lane-dense padding: Np sits on the lane axis of every big intermediate
    npp = _round_up(npts, 128)

    if gt_tile is None:
        # Largest 128-multiple gt tile whose big per-tile intermediates
        # (~6 f32 (Tg, Npp) buffers: d, row-id iota, one-hot, elementwise
        # temps) fit the budget.  Re-derive per generation (v5e: halve it).
        per_gt_row = 6 * npp * 4
        tg = (tile_budget_bytes // per_gt_row) // 128 * 128
        tg = int(max(128, min(tg, 2048)))
        tg = min(tg, _round_up(ng, 128))
    else:
        tg = int(gt_tile)
        assert tg % 128 == 0, "gt_tile must be a multiple of 128"
    ngp = _round_up(ng, tg)
    n_gt_tiles = ngp // tg

    # sentinel-pad so padded rows/cols never win a min (and are masked out of
    # the partial sums in-kernel); different signs keep pad-pad pairs distant.
    gt_p = jnp.pad(gt, ((0, 0), (0, ngp - ng), (0, 0)), constant_values=1.0e6)
    gtn_p = jnp.pad(gt_normal, ((0, 0), (0, ngp - ng), (0, 0)))
    pred_p = jnp.pad(pred, ((0, 0), (0, npp - npts), (0, 0)),
                     constant_values=-1.0e6)

    predt = jnp.transpose(pred_p, (0, 2, 1))     # (B, 3, Npp) lane-dense
    gtnt = jnp.transpose(gtn_p, (0, 2, 1))       # (B, 3, Ngp) lane-dense

    kernel = partial(_chamfer_nn_kernel, tg=tg, ng_valid=ng, np_valid=npts)

    sums, nnt = pl.pallas_call(
        kernel,
        out_shape=(jax.ShapeDtypeStruct((B, 1, 128), jnp.float32),
                   jax.ShapeDtypeStruct((B, 3, npp), jnp.float32)),
        grid=(B, n_gt_tiles),                    # gt (reduction) axis last
        in_specs=[
            pl.BlockSpec((1, tg, 3), lambda b, g: (b, g, 0)),
            pl.BlockSpec((1, 3, npp), lambda b, g: (b, 0, 0)),   # resident
            pl.BlockSpec((1, 3, tg), lambda b, g: (b, 0, g)),
        ],
        out_specs=(
            pl.BlockSpec((1, 1, 128), lambda b, g: (b, 0, 0)),   # sums accumulator
            pl.BlockSpec((1, 3, npp), lambda b, g: (b, 0, 0)),   # running nearest normals
        ),
        scratch_shapes=[pltpu.VMEM((1, npp), jnp.float32)],      # running dist2 min
        compiler_params=pltpu.CompilerParams(
            dimension_semantics=("parallel", "arbitrary"),
            vmem_limit_bytes=min(2 * tile_budget_bytes, 56 * 1024 * 1024),
        ),
        # TODO(synk): if production batch == 1, split the gt axis into two
        # "parallel" chunks (per-core running min / normals) and merge the
        # small (1,Npp)/(3,Npp) state in a cheap combine so v7x's 2nd TC is used.
    )(gt_p, predt, gtnt)

    sum_d1 = sums[:, 0, 0]                                   # (B,)
    sum_d2 = sums[:, 0, 1]                                   # (B,)
    nearest_normals = jnp.transpose(nnt, (0, 2, 1))[:, :npts, :]   # (B, Np, 3)
    return sum_d1, sum_d2, nearest_normals


# ---------------------------------------------------------------------------
# Plain-JAX glue (small E-sized gathers + regularizers)
# ---------------------------------------------------------------------------
def _l2_normalize(x, axis=-1, eps=1e-12):
    # matches torch F.normalize: x / max(||x||, eps)
    n = jnp.sqrt(jnp.sum(x * x, axis=axis, keepdims=True))
    return x / jnp.maximum(n, eps)


def laplace_coord(x, lap_idx):
    """x: (B, N, 3); lap_idx: (N, 10) = [8 neighbor ids (-1 pad), self, count]."""
    # TODO(synk): for very large meshes this XLA gather could move into a small
    # Pallas kernel with the neighbour table scalar-prefetched into SMEM.
    indices = lap_idx[:, :-2]                                # (N, 8)
    invalid = indices < 0
    safe = jnp.where(invalid, 0, indices)
    verts = x[:, safe]                                       # (B, N, 8, 3)
    verts = jnp.where(invalid[None, :, :, None], 0.0, verts)
    nsum = jnp.sum(verts, axis=2)                            # (B, N, 3)
    ncount = lap_idx[:, -1].astype(x.dtype)
    return x - nsum / ncount[None, :, None]


@partial(jax.jit, static_argnames=("gt_tile",))
def p2mpp_loss(gt_coord, gt_normal, pred_coord, pred_before, edges, laplace_idx,
               gt_tile=None):
    cfg = LOSS_CONFIG
    B, ng, _ = gt_coord.shape
    npts = pred_coord.shape[1]
    ne = edges.shape[0]

    # ---- chamfer + nearest-normal selection (Pallas kernel) ----------------
    sum_d1, sum_d2, nearest_normals = chamfer_with_nearest_normals(
        gt_coord, pred_coord, gt_normal, gt_tile=gt_tile)
    mean_d1 = jnp.sum(sum_d1) / (B * ng)       # torch.mean(dist1) over (B, Ng)
    mean_d2 = jnp.sum(sum_d2) / (B * npts)     # torch.mean(dist2) over (B, Np)

    # the torch forward calls chamfer_dist twice on identical args and adds both
    cw2 = cfg["chamfer_weights"][2]
    chamfer_loss = cw2 * (mean_d1 + cfg["chamfer_opposite_weights"] * mean_d2)
    chamfer_loss = chamfer_loss + cw2 * (mean_d1 + mean_d2)

    # ---- normal loss (E-sized gathers are tiny -> plain XLA) ---------------
    e0 = edges[:, 0]
    e1 = edges[:, 1]
    edge_vec = pred_coord[:, e0] - pred_coord[:, e1]          # (B, E, 3)
    edge_dir = _l2_normalize(edge_vec, axis=2)
    nrm_dir = _l2_normalize(nearest_normals[:, e0], axis=2)
    normal_loss = jnp.mean(jnp.abs(jnp.sum(edge_dir * nrm_dir, axis=2)))

    # ---- edge regularization: MSE(pred[e0], pred[e1]) * 3 == sum/(B*E) -----
    edge_loss = jnp.sum(edge_vec * edge_vec) / (B * ne)

    # ---- laplace regularization (block_idx = 2): MSE(lap1,lap2)*3 ----------
    lap1 = laplace_coord(pred_before, laplace_idx)
    lap2 = laplace_coord(pred_coord, laplace_idx)
    lapd = lap1 - lap2
    lap = jnp.sum(lapd * lapd) / (B * npts)
    lap_loss = LAP_CONST[2] * lap
    # TODO(synk): move_loss is computed by the torch module for block_idx > 0
    # but never added to the final loss in forward(); omitted on purpose.

    loss = (chamfer_loss
            + cfg["normal_weights"] * normal_loss
            + cfg["edge_weights"] * edge_loss
            + cfg["laplace_weights"] * lap_loss)
    loss = loss * cfg["constant_weights"]
    summary = {"loss": loss, "loss_chamfer": chamfer_loss,
               "loss_laplace": lap_loss, "loss_normal": normal_loss}
    return loss, summary


# ---------------------------------------------------------------------------
# Driver
# ---------------------------------------------------------------------------
if __name__ == "__main__":
    key = jax.random.PRNGKey(0)
    ks = jax.random.split(key, 8)
    B, NGT, NP, E = 2, 200, 48, 64     # NGT > 128 so two gt tiles are exercised

    gt_coord = jax.random.normal(ks[0], (B, NGT, 3), jnp.float32)
    gt_normal = jax.random.normal(ks[1], (B, NGT, 3), jnp.float32)
    pred_coord = 0.5 * jax.random.normal(ks[2], (B, NP, 3), jnp.float32)
    pred_before = pred_coord + 0.05 * jax.random.normal(ks[3], (B, NP, 3), jnp.float32)

    # synthetic "ellipsoid" connectivity: edges[2] and laplace_idx[2]
    e0 = jax.random.randint(ks[4], (E,), 0, NP)
    e1 = (e0 + 1 + jax.random.randint(ks[5], (E,), 0, NP - 1)) % NP
    edges = jnp.stack([e0, e1], axis=1).astype(jnp.int32)          # (E, 2)

    nbrs = jax.random.randint(ks[6], (NP, 8), 0, NP)
    counts = jax.random.randint(ks[7], (NP, 1), 3, 9)              # 3..8 neighbors
    col = jnp.arange(8)[None, :]
    nbrs = jnp.where(col < counts, nbrs, -1)
    self_idx = jnp.arange(NP, dtype=jnp.int32)[:, None]
    laplace_idx = jnp.concatenate(
        [nbrs, self_idx, counts], axis=1).astype(jnp.int32)        # (NP, 10)

    # gt_tile=128 forces the multi-tile (cross-tile merge / accumulator) path
    loss, summary = p2mpp_loss(gt_coord, gt_normal, pred_coord, pred_before,
                               edges, laplace_idx, gt_tile=128)
    jax.block_until_ready(loss)
    print("KERNEL_OK")
</pallas_src>

<mosaic_0001>
module attributes {stable_mosaic.version = 11 : i64} {
  func.func @_chamfer_nn_kernel(%arg0: i32, %arg1: i32, %arg2: memref<1x128x3xf32, #tpu.memory_space<vmem>>, %arg3: memref<1x3x128xf32, #tpu.memory_space<vmem>>, %arg4: memref<1x3x128xf32, #tpu.memory_space<vmem>>, %arg5: memref<1x1x128xf32, #tpu.memory_space<vmem>>, %arg6: memref<1x3x128xf32, #tpu.memory_space<vmem>>, %arg7: memref<1x128xf32, #tpu.memory_space<vmem>>) attributes {dimension_semantics = [#tpu.dimension_semantics<parallel>, #tpu.dimension_semantics<arbitrary>], iteration_bounds = array<i64: 2, 2>, scalar_prefetch = 0 : i64, scratch_operands = 1 : i64, tpu.core_type = #tpu.core_type<tc>, window_params = [{transform_indices = @transform_0, window_bounds = array<i64: 1, 128, 3>}, {transform_indices = @transform_1, window_bounds = array<i64: 1, 3, 128>}, {transform_indices = @transform_2, window_bounds = array<i64: 1, 3, 128>}, {transform_indices = @transform_3, window_bounds = array<i64: 1, 1, 128>}, {transform_indices = @transform_4, window_bounds = array<i64: 1, 3, 128>}]} {
    %c0 = arith.constant 0 : index
    %c0_0 = arith.constant 0 : index
    %c0_1 = arith.constant 0 : index
    %0 = vector.load %arg2[%c0, %c0_0, %c0_1] : memref<1x128x3xf32, #tpu.memory_space<vmem>>, vector<1x128x3xf32>
    %1 = vector.shape_cast %0 : vector<1x128x3xf32> to vector<128x3xf32>
    %c0_2 = arith.constant 0 : index
    %c0_3 = arith.constant 0 : index
    %c0_4 = arith.constant 0 : index
    %2 = vector.load %arg3[%c0_2, %c0_3, %c0_4] : memref<1x3x128xf32, #tpu.memory_space<vmem>>, vector<1x3x128xf32>
    %3 = vector.shape_cast %2 : vector<1x3x128xf32> to vector<3x128xf32>
    %c0_5 = arith.constant 0 : index
    %c0_6 = arith.constant 0 : index
    %c0_7 = arith.constant 0 : index
    %4 = vector.load %arg4[%c0_5, %c0_6, %c0_7] : memref<1x3x128xf32, #tpu.memory_space<vmem>>, vector<1x3x128xf32>
    %5 = vector.shape_cast %4 : vector<1x3x128xf32> to vector<3x128xf32>
    %6 = tpu.iota {dimensions = array<i32: 1>} : vector<1x128xi32>
    %c0_i32 = arith.constant 0 : i32
    %7 = arith.cmpi eq, %arg1, %c0_i32 : i32
    %8 = arith.extui %7 : i1 to i32
    %c0_i32_8 = arith.constant 0 : i32
    %9 = arith.cmpi ne, %8, %c0_i32_8 : i32
    scf.if %9 {
      %cst_36 = arith.constant 0x7F800000 : f32
      %84 = vector.broadcast %cst_36 : f32 to vector<1x128xf32>
      %c0_37 = arith.constant 0 : index
      %c0_38 = arith.constant 0 : index
      %85 = vector.load %arg7[%c0_37, %c0_38] : memref<1x128xf32, #tpu.memory_space<vmem>>, vector<1x128xf32>
      tpu.vector_store %arg7[%c0_37, %c0_38], %84 {strides = array<i32>} : memref<1x128xf32, #tpu.memory_space<vmem>>, vector<1x128xf32>,
      %cst_39 = arith.constant 0.000000e+00 : f32
      %86 = vector.broadcast %cst_39 : f32 to vector<1x3x128xf32>
      %c0_40 = arith.constant 0 : index
      %c0_41 = arith.constant 0 : index
      %c0_42 = arith.constant 0 : index
      %87 = vector.load %arg6[%c0_40, %c0_41, %c0_42] : memref<1x3x128xf32, #tpu.memory_space<vmem>>, vector<1x3x128xf32>
      tpu.vector_store %arg6[%c0_40, %c0_41, %c0_42], %86 {strides = array<i32>} : memref<1x3x128xf32, #tpu.memory_space<vmem>>, vector<1x3x128xf32>,
      %cst_43 = arith.constant 0.000000e+00 : f32
      %88 = vector.broadcast %cst_43 : f32 to vector<1x1x128xf32>
      %c0_44 = arith.constant 0 : index
      %c0_45 = arith.constant 0 : index
      %c0_46 = arith.constant 0 : index
      %89 = vector.load %arg5[%c0_44, %c0_45, %c0_46] : memref<1x1x128xf32, #tpu.memory_space<vmem>>, vector<1x1x128xf32>
      tpu.vector_store %arg5[%c0_44, %c0_45, %c0_46], %88 {strides = array<i32>} : memref<1x1x128xf32, #tpu.memory_space<vmem>>, vector<1x1x128xf32>,
    } else {
    }
    %10 = vector.extract_strided_slice %1 {offsets = [0, 0], sizes = [128, 1], strides = [1, 1]} : vector<128x3xf32> to vector<128x1xf32>
    %11 = vector.extract_strided_slice %3 {offsets = [0, 0], sizes = [1, 128], strides = [1, 1]} : vector<3x128xf32> to vector<1x128xf32>
    %12 = vector.broadcast %10 : vector<128x1xf32> to vector<128x128xf32>
    %13 = vector.broadcast %11 : vector<1x128xf32> to vector<128x128xf32>
    %14 = arith.subf %12, %13 : vector<128x128xf32>
    %15 = vector.extract_strided_slice %1 {offsets = [0, 1], sizes = [128, 1], strides = [1, 1]} : vector<128x3xf32> to vector<128x1xf32>
    %16 = vector.extract_strided_slice %3 {offsets = [1, 0], sizes = [1, 128], strides = [1, 1]} : vector<3x128xf32> to vector<1x128xf32>
    %17 = vector.broadcast %15 : vector<128x1xf32> to vector<128x128xf32>
    %18 = vector.broadcast %16 : vector<1x128xf32> to vector<128x128xf32>
    %19 = arith.subf %17, %18 : vector<128x128xf32>
    %20 = vector.extract_strided_slice %1 {offsets = [0, 2], sizes = [128, 1], strides = [1, 1]} : vector<128x3xf32> to vector<128x1xf32>
    %21 = vector.extract_strided_slice %3 {offsets = [2, 0], sizes = [1, 128], strides = [1, 1]} : vector<3x128xf32> to vector<1x128xf32>
    %22 = vector.broadcast %20 : vector<128x1xf32> to vector<128x128xf32>
    %23 = vector.broadcast %21 : vector<1x128xf32> to vector<128x128xf32>
    %24 = arith.subf %22, %23 : vector<128x128xf32>
    %25 = arith.mulf %14, %14 : vector<128x128xf32>
    %26 = arith.mulf %19, %19 : vector<128x128xf32>
    %27 = arith.addf %25, %26 : vector<128x128xf32>
    %28 = arith.mulf %24, %24 : vector<128x128xf32>
    %29 = arith.addf %27, %28 : vector<128x128xf32>
    %30 = tpu.iota {dimensions = array<i32: 0>} : vector<128x128xi32>
    %cst = arith.constant dense<0x7F800000> : vector<128xf32>
    %31 = vector.multi_reduction <minimumf>, %29, %cst [1] : vector<128x128xf32> to vector<128xf32>
    %32 = vector.shape_cast %31 : vector<128xf32> to vector<128x1xf32>
    %33 = vector.extract_strided_slice %30 {offsets = [0, 0], sizes = [128, 1], strides = [1, 1]} : vector<128x128xi32> to vector<128x1xi32>
    %c128_i32 = arith.constant 128 : i32
    %34 = arith.muli %arg1, %c128_i32 : i32
    %35 = vector.broadcast %34 : i32 to vector<128x1xi32>
    %36 = arith.addi %33, %35 : vector<128x1xi32>
    %c200_i32 = arith.constant 200 : i32
    %37 = vector.broadcast %c200_i32 : i32 to vector<128x1xi32>
    %38 = arith.cmpi slt, %36, %37 : vector<128x1xi32>
    %cst_9 = arith.constant 0.000000e+00 : f32
    %39 = vector.broadcast %cst_9 : f32 to vector<128x1xf32>
    %40 = arith.select %38, %32, %39 : vector<128x1xi1>, vector<128x1xf32>
    %cst_10 = arith.constant dense<0.000000e+00> : vector<1xf32>
    %41 = vector.multi_reduction <add>, %40, %cst_10 [0] : vector<128x1xf32> to vector<1xf32>
    %42 = vector.shape_cast %41 : vector<1xf32> to vector<1x1xf32>
    %c0_11 = arith.constant 0 : index
    %c0_12 = arith.constant 0 : index
    %c0_13 = arith.constant 0 : index
    %43 = vector.load %arg5[%c0_11, %c0_12, %c0_13] : memref<1x1x128xf32, #tpu.memory_space<vmem>>, vector<1x1x128xf32>
    %44 = vector.shape_cast %43 : vector<1x1x128xf32> to vector<1x128xf32>
    %c0_i32_14 = arith.constant 0 : i32
    %45 = vector.broadcast %c0_i32_14 : i32 to vector<1x128xi32>
    %46 = arith.cmpi eq, %6, %45 : vector<1x128xi32>
    %cst_15 = arith.constant 0.000000e+00 : f32
    %47 = vector.shape_cast %42 : vector<1x1xf32> to vector<1x1xf32>
    %48 = vector.broadcast %47 : vector<1x1xf32> to vector<1x128xf32>
    %49 = vector.broadcast %cst_15 : f32 to vector<1x128xf32>
    %50 = arith.select %46, %48, %49 : vector<1x128xi1>, vector<1x128xf32>
    %51 = arith.addf %44, %50 : vector<1x128xf32>
    %c0_16 = arith.constant 0 : index
    %c0_17 = arith.constant 0 : index
    %c0_18 = arith.constant 0 : index
    %52 = vector.load %arg5[%c0_16, %c0_17, %c0_18] : memref<1x1x128xf32, #tpu.memory_space<vmem>>, vector<1x1x128xf32>
    %53 = vector.shape_cast %52 : vector<1x1x128xf32> to vector<1x128xf32>
    %54 = vector.shape_cast %51 : vector<1x128xf32> to vector<1x1x128xf32>
    tpu.vector_store %arg5[%c0_16, %c0_17, %c0_18], %54 {strides = array<i32>} : memref<1x1x128xf32, #tpu.memory_space<vmem>>, vector<1x1x128xf32>,
    %cst_19 = arith.constant dense<0x7F800000> : vector<128xf32>
    %55 = vector.multi_reduction <minimumf>, %29, %cst_19 [0] : vector<128x128xf32> to vector<128xf32>
    %56 = vector.shape_cast %55 : vector<128xf32> to vector<1x128xf32>
    %57 = vector.broadcast %56 : vector<1x128xf32> to vector<128x128xf32>
    %58 = arith.cmpf ole, %29, %57 : vector<128x128xf32>
    %c128_i32_20 = arith.constant 128 : i32
    %59 = vector.broadcast %c128_i32_20 : i32 to vector<128x128xi32>
    %60 = arith.select %58, %30, %59 : vector<128x128xi1>, vector<128x128xi32>
    %cst_21 = arith.constant dense<2147483647> : vector<128xi32>
    %61 = vector.multi_reduction <minsi>, %60, %cst_21 [0] : vector<128x128xi32> to vector<128xi32>
    %62 = vector.shape_cast %61 : vector<128xi32> to vector<1x128xi32>
    %63 = vector.broadcast %62 : vector<1x128xi32> to vector<128x128xi32>
    %64 = arith.cmpi eq, %30, %63 : vector<128x128xi32>
    %65 = arith.extui %64 : vector<128x128xi1> to vector<128x128xi32>
    %66 = arith.sitofp %65 : vector<128x128xi32> to vector<128x128xf32>
    %cst_22 = arith.constant dense<0.000000e+00> : vector<3x128xf32>
    %67 = tpu.matmul %5, %66, %cst_22 {dimension_numbers = #tpu.dot_dimension_numbers<[1], [0], [0], [1], [0, 0, 1, 1], [], []>} : vector<3x128xf32>, vector<128x128xf32>, vector<3x128xf32> -> vector<3x128xf32>
    %c0_23 = arith.constant 0 : index
    %c0_24 = arith.constant 0 : index
    %68 = vector.load %arg7[%c0_23, %c0_24] : memref<1x128xf32, #tpu.memory_space<vmem>>, vector<1x128xf32>
    %69 = arith.cmpf olt, %56, %68 : vector<1x128xf32>
    %c0_25 = arith.constant 0 : index
    %c0_26 = arith.constant 0 : index
    %70 = vector.load %arg7[%c0_25, %c0_26] : memref<1x128xf32, #tpu.memory_space<vmem>>, vector<1x128xf32>
    %71 = arith.select %69, %56, %70 : vector<1x128xi1>, vector<1x128xf32>
    %c0_27 = arith.constant 0 : index
    %c0_28 = arith.constant 0 : index
    %72 = vector.load %arg7[%c0_27, %c0_28] : memref<1x128xf32, #tpu.memory_space<vmem>>, vector<1x128xf32>
    tpu.vector_store %arg7[%c0_27, %c0_28], %71 {strides = array<i32>} : memref<1x128xf32, #tpu.memory_space<vmem>>, vector<1x128xf32>,
    %c0_29 = arith.constant 0 : index
    %c0_30 = arith.constant 0 : index
    %c0_31 = arith.constant 0 : index
    %73 = vector.load %arg6[%c0_29, %c0_30, %c0_31] : memref<1x3x128xf32, #tpu.memory_space<vmem>>, vector<1x3x128xf32>
    %74 = vector.shape_cast %73 : vector<1x3x128xf32> to vector<3x128xf32>
    %75 = vector.shape_cast %69 : vector<1x128xi1> to vector<1x128xi1>
    %76 = vector.broadcast %75 : vector<1x128xi1> to vector<3x128xi1>
    %77 = arith.select %76, %67, %74 : vector<3x128xi1>, vector<3x128xf32>
    %c0_32 = arith.constant 0 : index
    %c0_33 = arith.constant 0 : index
    %c0_34 = arith.constant 0 : index
    %78 = vector.load %arg6[%c0_32, %c0_33, %c0_34] : memref<1x3x128xf32, #tpu.memory_space<vmem>>, vector<1x3x128xf32>
    %79 = vector.shape_cast %78 : vector<1x3x128xf32> to vector<3x128xf32>
    %80 = vector.shape_cast %77 : vector<3x128xf32> to vector<1x3x128xf32>
    tpu.vector_store %arg6[%c0_32, %c0_33, %c0_34], %80 {strides = array<i32>} : memref<1x3x128xf32, #tpu.memory_space<vmem>>, vector<1x3x128xf32>,
    %c1_i32 = arith.constant 1 : i32
    %81 = arith.cmpi eq, %arg1, %c1_i32 : i32
    %82 = arith.extui %81 : i1 to i32
    %c0_i32_35 = arith.constant 0 : i32
    %83 = arith.cmpi ne, %82, %c0_i32_35 : i32
    scf.if %83 {
      %84 = tpu.iota {dimensions = array<i32: 1>} : vector<1x128xi32>
      %c48_i32 = arith.constant 48 : i32
      %85 = vector.broadcast %c48_i32 : i32 to vector<1x128xi32>
      %86 = arith.cmpi slt, %84, %85 : vector<1x128xi32>
      %c0_36 = arith.constant 0 : index
      %c0_37 = arith.constant 0 : index
      %87 = vector.load %arg7[%c0_36, %c0_37] : memref<1x128xf32, #tpu.memory_space<vmem>>, vector<1x128xf32>
      %cst_38 = arith.constant 0.000000e+00 : f32
      %88 = vector.broadcast %cst_38 : f32 to vector<1x128xf32>
      %89 = arith.select %86, %87, %88 : vector<1x128xi1>, vector<1x128xf32>
      %cst_39 = arith.constant dense<0.000000e+00> : vector<1xf32>
      %90 = vector.multi_reduction <add>, %89, %cst_39 [1] : vector<1x128xf32> to vector<1xf32>
      %91 = vector.shape_cast %90 : vector<1xf32> to vector<1x1xf32>
      %c0_40 = arith.constant 0 : index
      %c0_41 = arith.constant 0 : index
      %c0_42 = arith.constant 0 : index
      %92 = vector.load %arg5[%c0_40, %c0_41, %c0_42] : memref<1x1x128xf32, #tpu.memory_space<vmem>>, vector<1x1x128xf32>
      %93 = vector.shape_cast %92 : vector<1x1x128xf32> to vector<1x128xf32>
      %c1_i32_43 = arith.constant 1 : i32
      %94 = vector.broadcast %c1_i32_43 : i32 to vector<1x128xi32>
      %95 = arith.cmpi eq, %6, %94 : vector<1x128xi32>
      %cst_44 = arith.constant 0.000000e+00 : f32
      %96 = vector.shape_cast %91 : vector<1x1xf32> to vector<1x1xf32>
      %97 = vector.broadcast %96 : vector<1x1xf32> to vector<1x128xf32>
      %98 = vector.broadcast %cst_44 : f32 to vector<1x128xf32>
      %99 = arith.select %95, %97, %98 : vector<1x128xi1>, vector<1x128xf32>
      %100 = arith.addf %93, %99 : vector<1x128xf32>
      %c0_45 = arith.constant 0 : index
      %c0_46 = arith.constant 0 : index
      %c0_47 = arith.constant 0 : index
      %101 = vector.load %arg5[%c0_45, %c0_46, %c0_47] : memref<1x1x128xf32, #tpu.memory_space<vmem>>, vector<1x1x128xf32>
      %102 = vector.shape_cast %101 : vector<1x1x128xf32> to vector<1x128xf32>
      %103 = vector.shape_cast %100 : vector<1x128xf32> to vector<1x1x128xf32>
      tpu.vector_store %arg5[%c0_45, %c0_46, %c0_47], %103 {strides = array<i32>} : memref<1x1x128xf32, #tpu.memory_space<vmem>>, vector<1x1x128xf32>,
    } else {
    }
    return
  }
  func.func @transform_0(%arg0: i32, %arg1: i32) -> (i32, i32, i32) {
    %c0_i32 = arith.constant 0 : i32
    %c0_i32_0 = arith.constant 0 : i32
    return %arg0, %arg1, %c0_i32 : i32, i32, i32
  }
  func.func @transform_1(%arg0: i32, %arg1: i32) -> (i32, i32, i32) {
    %c0_i32 = arith.constant 0 : i32
    %c0_i32_0 = arith.constant 0 : i32
    %c0_i32_1 = arith.constant 0 : i32
    return %arg0, %c0_i32, %c0_i32_0 : i32, i32, i32
  }
  func.func @transform_2(%arg0: i32, %arg1: i32) -> (i32, i32, i32) {
    %c0_i32 = arith.constant 0 : i32
    %c0_i32_0 = arith.constant 0 : i32
    return %arg0, %c0_i32, %arg1 : i32, i32, i32
  }
  func.func @transform_3(%arg0: i32, %arg1: i32) -> (i32, i32, i32) {
    %c0_i32 = arith.constant 0 : i32
    %c0_i32_0 = arith.constant 0 : i32
    %c0_i32_1 = arith.constant 0 : i32
    return %arg0, %c0_i32, %c0_i32_0 : i32, i32, i32
  }
  func.func @transform_4(%arg0: i32, %arg1: i32) -> (i32, i32, i32) {
    %c0_i32 = arith.constant 0 : i32
    %c0_i32_0 = arith.constant 0 : i32
    %c0_i32_1 = arith.constant 0 : i32
    return %arg0, %c0_i32, %c0_i32_0 : i32, i32, i32
  }
}

</mosaic_0001>

<llo_original>
// kernel: p2mpp_loss.1
$region0: #{p2mpp_loss.1}
  #allocation0 [shape = 'u32[]', space=smem, size = 0x4, offset = 0x4, fixed_abs, tag = 'smem constant byte address 0x4 - core index']
  #allocation1 [shape = 'u32[144,128]{1,0:T(1,128)}', space=vmem, size = 0x12000, scoped, tag = 'internal scratch']
  #allocation2 [shape = 'f32[1,128]{1,0:T(1,128)}', space=vmem, size = 0x200, scoped, tag = 'scratch operand']
  %s0 = inlined_call_operand.vmem [shape: f32[2,256,3], index: 0, kind: input, shape index: {}]
  %s1 = inlined_call_operand.vmem [shape: f32[2,3,128], index: 1, kind: input, shape index: {}]
  %s2 = inlined_call_operand.vmem [shape: f32[2,3,256], index: 2, kind: input, shape index: {}]
  %s3 = inlined_call_operand.vmem [shape: f32[2,1,128], index: 3, kind: output, shape index: {0}]
  %s4 = inlined_call_operand.vmem [shape: f32[2,3,128], index: 4, kind: output, shape index: {1}]
  %5 = xla_tuple %s3, %s4
  %s6 = sld [smem:[#allocation0]]
  $region61: #{p2mpp_loss.1} parent=0
    _
  %s8 = ssub.s32 1, %s6
  %s9 = scalar_select 0, %s8, %s6
  loop: start=0, step=1, limit=6
  $region2: #{p2mpp_loss.1} parent=0 // loop_pre_header
    _
  $region3: #{p2mpp_loss.1} parent=0 // loop_header
    %s11 = sphi 0, %s15
    %p12 = scmp.ge.s32.totalorder %s11, 6
    %s18 = sphi 0, %s30
    %s19 = sphi 0, %s26
    %s20 = sphi 0, %s18
    %s21 = sphi 0, %s19
    %s22 = sphi 0, %s20
    %s23 = sphi 0, %s21
    %s35 = sphi 0, %s37
    %s38 = sphi 0, %s35
    %s39 = sphi 0, %s38
    %s55 = sphi 0, %s39
    %s61 = sphi 0, %s63
    %s64 = sphi 0, %s61
    %s65 = sphi 0, %s64
    %s81 = sphi 0, %s65
    %s89 = sphi 0, %s91
    %s92 = sphi 0, %s89
    %s93 = sphi 0, %s92
    %s109 = sphi 0, %s93
    %s115 = sphi 0, %s117
    %s118 = sphi 0, %s115
    %s119 = sphi 0, %s118
    %s135 = sphi 0, %s119
    %s141 = sphi 0, %s143
    %s144 = sphi 0, %s141
    %s145 = sphi 0, %s144
    %s161 = sphi 0, %s145
  $region4: #{p2mpp_loss.1} parent=0 // loop_header_branch
    %14 = sbr.rel (%p12) target = $region8
  $region5: #{p2mpp_loss.1} parent=0 // loop_body
    %s16 = ssub.s32 %s11, 1
    %s17 = ssub.s32 %s11, 2
    %s24 = sadd.s32 1, %s19
    %p25 = scmp.ge.s32.totalorder %s24, 2
    %s26 = scalar_select %p25, 0, %s24
    %s27 = sadd.s32 1, %s18
    %s28 = scalar_select %p25, %s27, %s18
    %p29 = scmp.ge.s32.totalorder %s28, 2
    %s30 = scalar_select %p29, 0, %s28
    %s31 = ssub.s32 %s18, %s30
    %s32 = ssub.s32 %s19, %s26
    %s33 = sor.u32 %s31, %s32
    %p34 = scmp.eq.s32.totalorder %s33, 0
    %s36 = sadd.s32 %s35, 1
    %s37 = scalar_select %p34, %s35, %s36
    %p40 = pneg %p34
    %p41 = scmp.eq.s32.totalorder %s11, 3
    %p42 = por %p40, %p41
    %p43 = scmp.ne.s32.totalorder %s35, %s38
    %p44 = scmp.eq.s32.totalorder %s11, 0
    %p45 = por %p43, %p44
    %p46 = scmp.ne.s32.totalorder %s35, %s38
    %p47 = scmp.eq.s32.totalorder %s16, 3
    %p48 = por %p46, %p47
    %p49 = scmp.ne.s32.totalorder %s38, %s39
    %p50 = scmp.eq.s32.totalorder %s16, 0
    %p51 = por %p49, %p50
    %p52 = scmp.ne.s32.totalorder %s38, %s39
    %p53 = scmp.eq.s32.totalorder %s17, 3
    %p54 = por %p52, %p53
    %p56 = scmp.ne.s32.totalorder %s39, %s55
    %p57 = scmp.eq.s32.totalorder %s17, 0
    %p58 = por %p56, %p57
    %s59 = ssub.s32 %s18, %s30
    %p60 = scmp.eq.s32.totalorder %s59, 0
    %s62 = sadd.s32 %s61, 1
    %s63 = scalar_select %p60, %s61, %s62
    %p66 = pneg %p60
    %p67 = scmp.eq.s32.totalorder %s11, 3
    %p68 = por %p66, %p67
    %p69 = scmp.ne.s32.totalorder %s61, %s64
    %p70 = scmp.eq.s32.totalorder %s11, 0
    %p71 = por %p69, %p70
    %p72 = scmp.ne.s32.totalorder %s61, %s64
    %p73 = scmp.eq.s32.totalorder %s16, 3
    %p74 = por %p72, %p73
    %p75 = scmp.ne.s32.totalorder %s64, %s65
    %p76 = scmp.eq.s32.totalorder %s16, 0
    %p77 = por %p75, %p76
    %p78 = scmp.ne.s32.totalorder %s64, %s65
    %p79 = scmp.eq.s32.totalorder %s17, 3
    %p80 = por %p78, %p79
    %p82 = scmp.ne.s32.totalorder %s65, %s81
    %p83 = scmp.eq.s32.totalorder %s17, 0
    %p84 = por %p82, %p83
    %s85 = ssub.s32 %s18, %s30
    %s86 = ssub.s32 %s19, %s26
    %s87 = sor.u32 %s85, %s86
    %p88 = scmp.eq.s32.totalorder %s87, 0
    %s90 = sadd.s32 %s89, 1
    %s91 = scalar_select %p88, %s89, %s90
    %p94 = pneg %p88
    %p95 = scmp.eq.s32.totalorder %s11, 3
    %p96 = por %p94, %p95
    %p97 = scmp.ne.s32.totalorder %s89, %s92
    %p98 = scmp.eq.s32.totalorder %s11, 0
    %p99 = por %p97, %p98
    %p100 = scmp.ne.s32.totalorder %s89, %s92
    %p101 = scmp.eq.s32.totalorder %s16, 3
    %p102 = por %p100, %p101
    %p103 = scmp.ne.s32.totalorder %s92, %s93
    %p104 = scmp.eq.s32.totalorder %s16, 0
    %p105 = por %p103, %p104
    %p106 = scmp.ne.s32.totalorder %s92, %s93
    %p107 = scmp.eq.s32.totalorder %s17, 3
    %p108 = por %p106, %p107
    %p110 = scmp.ne.s32.totalorder %s93, %s109
    %p111 = scmp.eq.s32.totalorder %s17, 0
    %p112 = por %p110, %p111
    %s113 = ssub.s32 %s18, %s30
    %p114 = scmp.eq.s32.totalorder %s113, 0
    %s116 = sadd.s32 %s115, 1
    %s117 = scalar_select %p114, %s115, %s116
    %p120 = pneg %p114
    %p121 = scmp.eq.s32.totalorder %s11, 3
    %p122 = por %p120, %p121
    %p123 = scmp.ne.s32.totalorder %s115, %s118
    %p124 = scmp.eq.s32.totalorder %s11, 0
    %p125 = por %p123, %p124
    %p126 = scmp.ne.s32.totalorder %s115, %s118
    %p127 = scmp.eq.s32.totalorder %s16, 3
    %p128 = por %p126, %p127
    %p129 = scmp.ne.s32.totalorder %s118, %s119
    %p130 = scmp.eq.s32.totalorder %s16, 0
    %p131 = por %p129, %p130
    %p132 = scmp.ne.s32.totalorder %s118, %s119
    %p133 = scmp.eq.s32.totalorder %s17, 3
    %p134 = por %p132, %p133
    %p136 = scmp.ne.s32.totalorder %s119, %s135
    %p137 = scmp.eq.s32.totalorder %s17, 0
    %p138 = por %p136, %p137
    %s139 = ssub.s32 %s18, %s30
    %p140 = scmp.eq.s32.totalorder %s139, 0
    %s142 = sadd.s32 %s141, 1
    %s143 = scalar_select %p140, %s141, %s142
    %p146 = pneg %p140
    %p147 = scmp.eq.s32.totalorder %s11, 3
    %p148 = por %p146, %p147
    %p149 = scmp.ne.s32.totalorder %s141, %s144
    %p150 = scmp.eq.s32.totalorder %s11, 0
    %p151 = por %p149, %p150
    %p152 = scmp.ne.s32.totalorder %s141, %s144
    %p153 = scmp.eq.s32.totalorder %s16, 3
    %p154 = por %p152, %p153
    %p155 = scmp.ne.s32.totalorder %s144, %s145
    %p156 = scmp.eq.s32.totalorder %s16, 0
    %p157 = por %p155, %p156
    %p158 = scmp.ne.s32.totalorder %s144, %s145
    %p159 = scmp.eq.s32.totalorder %s17, 3
    %p160 = por %p158, %p159
    %p162 = scmp.ne.s32.totalorder %s145, %s161
    %p163 = scmp.eq.s32.totalorder %s17, 0
    %p164 = por %p162, %p163
    %p165 = scmp.le.s32.totalorder 1, %s11
    %p166 = scmp.lt.s32.totalorder %s11, 5
    %p167 = pnand %p165, %p166
    %p168 = pneg %p167
    // Predicated region
    $region9: #{p2mpp_loss.1} parent=5 // pred_check
      _
    $region10: #{p2mpp_loss.1} parent=5 // pred_check_branch
      %170 = sbr.rel (%p167) target = $region12
    $region11: #{p2mpp_loss.1} parent=5 // pred_region
      %s171 = ssub.s32 %s11, 1
    $region12: #{p2mpp_loss.1} parent=5 // pred_fallthru
      _
    %p172 = scmp.lt.s32.totalorder %s11, 4
    // Predicated region
    $region13: #{p2mpp_loss.1} parent=5 // pred_check
      %p173 = pneg %p172
    $region14: #{p2mpp_loss.1} parent=5 // pred_check_branch
      %175 = sbr.rel (%p173) target = $region16
    $region15: #{p2mpp_loss.1} parent=5 // pred_region
      // Predicated region
      $region17: #{p2mpp_loss.1} parent=15 // pred_check
        %p176 = pneg %p45
      $region18: #{p2mpp_loss.1} parent=15 // pred_check_branch
        %178 = sbr.rel (%p176) target = $region20
      $region19: #{p2mpp_loss.1} parent=15 // pred_region
        %s179 = smul.u32 16, %s19
        %p180 = scmp.lt.s32.totalorder %s18, 1
        %s181 = scalar_select %p180, %s18, 1
        %p182 = scmp.lt.s32.totalorder %s179, 31
        %s183 = scalar_select %p182, %s179, 31
        %s184 = smul.addr %s181, 32
        %s185 = sadd.s32 %s183, %s184
        %s186 = smul.addr %s185, 8
        %s187 = scalar_lea.vmem %s0, %s186
        %s188 = smul.u32 16, %s19
      $region20: #{p2mpp_loss.1} parent=15 // pred_fallthru
        _
      // Predicated region
      $region21: #{p2mpp_loss.1} parent=15 // pred_check
        %p189 = pneg %p71
      $region22: #{p2mpp_loss.1} parent=15 // pred_check_branch
        %191 = sbr.rel (%p189) target = $region24
      $region23: #{p2mpp_loss.1} parent=15 // pred_region
        %p192 = scmp.lt.s32.totalorder %s18, 1
        %s193 = scalar_select %p192, %s18, 1
        %s194 = smul.addr %s193, 4
        %s195 = scalar_lea.vmem %s1, %s194
      $region24: #{p2mpp_loss.1} parent=15 // pred_fallthru
        _
      // Predicated region
      $region25: #{p2mpp_loss.1} parent=15 // pred_check
        %p196 = pneg %p99
      $region26: #{p2mpp_loss.1} parent=15 // pred_check_branch
        %198 = sbr.rel (%p196) target = $region28
      $region27: #{p2mpp_loss.1} parent=15 // pred_region
        %p199 = scmp.lt.s32.totalorder %s18, 1
        %s200 = scalar_select %p199, %s18, 1
        %p201 = scmp.lt.s32.totalorder %s19, 1
        %s202 = scalar_select %p201, %s19, 1
        %s203 = smul.addr %s200, 2
        %s204 = sadd.s32 %s202, %s203
        %s205 = smul.addr %s204, 4
        %s206 = scalar_lea.vmem %s2, %s205
      $region28: #{p2mpp_loss.1} parent=15 // pred_fallthru
        _
    $region16: #{p2mpp_loss.1} parent=5 // pred_fallthru
      _
    %p207 = scmp.le.s32.totalorder 1, %s11
    %p208 = scmp.lt.s32.totalorder %s11, 5
    %p209 = pnand %p207, %p208
    %p210 = pneg %p209
    // Predicated region
    $region29: #{p2mpp_loss.1} parent=5 // pred_check
      _
    $region30: #{p2mpp_loss.1} parent=5 // pred_check_branch
      %212 = sbr.rel (%p209) target = $region32
    $region31: #{p2mpp_loss.1} parent=5 // pred_region
      %s213 = ssub.s32 %s11, 1
      %s214 = smul.u32 16, %s21
      %p215 = scmp.lt.s32.totalorder %s20, 1
      %s216 = scalar_select %p215, %s20, 1
      %p217 = scmp.lt.s32.totalorder %s214, 31
      %s218 = scalar_select %p217, %s214, 31
      %s219 = smul.addr %s216, 32
      %s220 = sadd.s32 %s218, %s219
      %s221 = smul.addr %s220, 8
      %s222 = scalar_lea.vmem %s0, %s221
      %p223 = pneg %p51
      %p224 = pneg %p48
      %p225 = scmp.lt.s32.totalorder %s20, 1
      %s226 = scalar_select %p225, %s20, 1
      %s227 = smul.addr %s226, 4
      %s228 = scalar_lea.vmem %s1, %s227
      %p229 = pneg %p77
      %p230 = pneg %p74
      %p231 = scmp.lt.s32.totalorder %s20, 1
      %s232 = scalar_select %p231, %s20, 1
      %p233 = scmp.lt.s32.totalorder %s21, 1
      %s234 = scalar_select %p233, %s21, 1
      %s235 = smul.addr %s232, 2
      %s236 = sadd.s32 %s234, %s235
      %s237 = smul.addr %s236, 4
      %s238 = scalar_lea.vmem %s2, %s237
      %p239 = pneg %p105
      %p240 = pneg %p102
      %p241 = pneg %p131
      %p242 = pneg %p128
      %p243 = scmp.lt.s32.totalorder %s20, 1
      %s244 = scalar_select %p243, %s20, 1
      %s245 = scalar_lea.vmem %s3, %s244
      %p246 = pneg %p157
      %p247 = pneg %p154
      %p248 = scmp.lt.s32.totalorder %s20, 1
      %s249 = scalar_select %p248, %s20, 1
      %s250 = smul.addr %s249, 4
      %s251 = scalar_lea.vmem %s4, %s250
      %s252 = smul.u32 16, %s21
      %p253 = scmp.lt.s32.totalorder %s20, 1
      %s254 = scalar_select %p253, %s20, 1
      %p255 = scmp.lt.s32.totalorder %s252, 31
      %s256 = scalar_select %p255, %s252, 31
      %s257 = smul.addr %s254, 32
      %s258 = sadd.s32 %s256, %s257
      %s259 = smul.addr %s258, 8
      %s260 = scalar_lea.vmem %s0, %s259
      %s261 = smul.u32 16, %s21
      %p262 = scmp.lt.s32.totalorder %s20, 1
      %s263 = scalar_select %p262, %s20, 1
      %s264 = smul.addr %s263, 4
      %s265 = scalar_lea.vmem %s1, %s264
      %p266 = scmp.lt.s32.totalorder %s20, 1
      %s267 = scalar_select %p266, %s20, 1
      %p268 = scmp.lt.s32.totalorder %s21, 1
      %s269 = scalar_select %p268, %s21, 1
      %s270 = smul.addr %s267, 2
      %s271 = sadd.s32 %s269, %s270
      %s272 = smul.addr %s271, 4
      %s273 = scalar_lea.vmem %s2, %s272
      %p274 = scmp.lt.s32.totalorder %s20, 1
      %s275 = scalar_select %p274, %s20, 1
      %s276 = scalar_lea.vmem %s3, %s275
      %p277 = scmp.lt.s32.totalorder %s20, 1
      %s278 = scalar_select %p277, %s20, 1
      %s279 = smul.addr %s278, 4
      %s280 = scalar_lea.vmem %s4, %s279
      %v281 = vld [vmem:[%s260] sm:$0xff]
      %v282 = vld [vmem:[%s260 + $0x8] sm:$0xff]
      %v283 = vld [vmem:[%s260 + $0x10] sm:$0xff]
      %v284 = vld [vmem:[%s260 + $0x18] sm:$0xff]
      %v285 = vld [vmem:[%s260 + $0x20] sm:$0xff]
      %v286 = vld [vmem:[%s260 + $0x28] sm:$0xff]
      %v287 = vld [vmem:[%s260 + $0x30] sm:$0xff]
      %v288 = vld [vmem:[%s260 + $0x38] sm:$0xff]
      %v289 = vld [vmem:[%s260 + $0x40] sm:$0xff]
      %v290 = vld [vmem:[%s260 + $0x48] sm:$0xff]
      %v291 = vld [vmem:[%s260 + $0x50] sm:$0xff]
      %v292 = vld [vmem:[%s260 + $0x58] sm:$0xff]
      %v293 = vld [vmem:[%s260 + $0x60] sm:$0xff]
      %v294 = vld [vmem:[%s260 + $0x68] sm:$0xff]
      %v295 = vld [vmem:[%s260 + $0x70] sm:$0xff]
      %v296 = vld [vmem:[%s260 + $0x78] sm:$0xff]
      %v297 = vld [vmem:[%s265] sm:$0x7]
      %v298 = vld [vmem:[%s273] sm:$0x7]
      %v299 = vlaneseq
      %v300 = vand.u32 %v299, 127
      %p301 = scmp.eq.s32.totalorder %s21, 0
      // Predicated region
      $region33: #{p2mpp_loss.1} parent=31 // pred_check
        %p302 = pneg %p301
      $region34: #{p2mpp_loss.1} parent=31 // pred_check_branch
        %304 = sbr.rel (%p302) target = $region36
      $region35: #{p2mpp_loss.1} parent=31 // pred_region
        %305 = vst [vmem:[#allocation2] sm:$0x1] inf
        %306 = vst [vmem:[%s280] sm:$0x7] 0.0
        %307 = vst [vmem:[%s276] sm:$0x1] 0.0
      $region36: #{p2mpp_loss.1} parent=31 // pred_fallthru
        _
      %309 = vset.pattern.permute.xlu0 0
      %310 = vperm.xlu0 %309, %v281
      %v311 = vpop.permute.xlu0 %310
      %314 = vset.pattern.permute.xlu0 0
      %315 = vperm.xlu0 %314, %v282
      %v316 = vpop.permute.xlu0 %315
      %319 = vset.pattern.permute.xlu0 0
      %320 = vperm.xlu0 %319, %v283
      %v321 = vpop.permute.xlu0 %320
      %324 = vset.pattern.permute.xlu0 0
      %325 = vperm.xlu0 %324, %v284
      %v326 = vpop.permute.xlu0 %325
      %329 = vset.pattern.permute.xlu0 0
      %330 = vperm.xlu0 %329, %v285
      %v331 = vpop.permute.xlu0 %330
      %334 = vset.pattern.permute.xlu0 0
      %335 = vperm.xlu0 %334, %v286
      %v336 = vpop.permute.xlu0 %335
      %339 = vset.pattern.permute.xlu0 0
      %340 = vperm.xlu0 %339, %v287
      %v341 = vpop.permute.xlu0 %340
      %344 = vset.pattern.permute.xlu0 0
      %345 = vperm.xlu0 %344, %v288
      %v346 = vpop.permute.xlu0 %345
      %349 = vset.pattern.permute.xlu0 0
      %350 = vperm.xlu0 %349, %v289
      %v351 = vpop.permute.xlu0 %350
      %354 = vset.pattern.permute.xlu0 0
      %355 = vperm.xlu0 %354, %v290
      %v356 = vpop.permute.xlu0 %355
      %359 = vset.pattern.permute.xlu0 0
      %360 = vperm.xlu0 %359, %v291
      %v361 = vpop.permute.xlu0 %360
      %364 = vset.pattern.permute.xlu0 0
      %365 = vperm.xlu0 %364, %v292
      %v366 = vpop.permute.xlu0 %365
      %369 = vset.pattern.permute.xlu0 0
      %370 = vperm.xlu0 %369, %v293
      %v371 = vpop.permute.xlu0 %370
      %374 = vset.pattern.permute.xlu0 0
      %375 = vperm.xlu0 %374, %v294
      %v376 = vpop.permute.xlu0 %375
      %379 = vset.pattern.permute.xlu0 0
      %380 = vperm.xlu0 %379, %v295
      %v381 = vpop.permute.xlu0 %380
      %384 = vset.pattern.permute.xlu0 0
      %385 = vperm.xlu0 %384, %v296
      %v386 = vpop.permute.xlu0 %385
      %v388 = vlaneseq
      %v389 = vshrl.u32 %v388, 7
      %v390 = vsub.s32 0, %v389
      %v391 = vrot.slane %v297, %v390
      %v392 = vsub.f32 %v311, %v391
      %v393 = vsub.f32 %v316, %v391
      %v394 = vsub.f32 %v321, %v391
      %v395 = vsub.f32 %v326, %v391
      %v396 = vsub.f32 %v331, %v391
      %v397 = vsub.f32 %v336, %v391
      %v398 = vsub.f32 %v341, %v391
      %v399 = vsub.f32 %v346, %v391
      %v400 = vsub.f32 %v351, %v391
      %v401 = vsub.f32 %v356, %v391
      %v402 = vsub.f32 %v361, %v391
      %v403 = vsub.f32 %v366, %v391
      %v404 = vsub.f32 %v371, %v391
      %v405 = vsub.f32 %v376, %v391
      %v406 = vsub.f32 %v381, %v391
      %v407 = vsub.f32 %v386, %v391
      %408 = vset.pattern.permute.xlu0 1
      %409 = vperm.xlu0 %408, %v281
      %v410 = vpop.permute.xlu0 %409
      %412 = vset.pattern.permute.xlu0 1
      %413 = vperm.xlu0 %412, %v282
      %v414 = vpop.permute.xlu0 %413
      %416 = vset.pattern.permute.xlu0 1
      %417 = vperm.xlu0 %416, %v283
      %v418 = vpop.permute.xlu0 %417
      %420 = vset.pattern.permute.xlu0 1
      %421 = vperm.xlu0 %420, %v284
      %v422 = vpop.permute.xlu0 %421
      %424 = vset.pattern.permute.xlu0 1
      %425 = vperm.xlu0 %424, %v285
      %v426 = vpop.permute.xlu0 %425
      %428 = vset.pattern.permute.xlu0 1
      %429 = vperm.xlu0 %428, %v286
      %v430 = vpop.permute.xlu0 %429
      %432 = vset.pattern.permute.xlu0 1
      %433 = vperm.xlu0 %432, %v287
      %v434 = vpop.permute.xlu0 %433
      %436 = vset.pattern.permute.xlu0 1
      %437 = vperm.xlu0 %436, %v288
      %v438 = vpop.permute.xlu0 %437
      %440 = vset.pattern.permute.xlu0 1
      %441 = vperm.xlu0 %440, %v289
      %v442 = vpop.permute.xlu0 %441
      %444 = vset.pattern.permute.xlu0 1
      %445 = vperm.xlu0 %444, %v290
      %v446 = vpop.permute.xlu0 %445
      %448 = vset.pattern.permute.xlu0 1
      %449 = vperm.xlu0 %448, %v291
      %v450 = vpop.permute.xlu0 %449
      %452 = vset.pattern.permute.xlu0 1
      %453 = vperm.xlu0 %452, %v292
      %v454 = vpop.permute.xlu0 %453
      %456 = vset.pattern.permute.xlu0 1
      %457 = vperm.xlu0 %456, %v293
      %v458 = vpop.permute.xlu0 %457
      %460 = vset.pattern.permute.xlu0 1
      %461 = vperm.xlu0 %460, %v294
      %v462 = vpop.permute.xlu0 %461
      %464 = vset.pattern.permute.xlu0 1
      %465 = vperm.xlu0 %464, %v295
      %v466 = vpop.permute.xlu0 %465
      %468 = vset.pattern.permute.xlu0 1
      %469 = vperm.xlu0 %468, %v296
      %v470 = vpop.permute.xlu0 %469
      %v472 = vlaneseq
      %v473 = vshrl.u32 %v472, 7
      %v474 = vsub.s32 1, %v473
      %v475 = vrot.slane %v297, %v474
      %v476 = vsub.f32 %v410, %v475
      %v477 = vsub.f32 %v414, %v475
      %v478 = vsub.f32 %v418, %v475
      %v479 = vsub.f32 %v422, %v475
      %v480 = vsub.f32 %v426, %v475
      %v481 = vsub.f32 %v430, %v475
      %v482 = vsub.f32 %v434, %v475
      %v483 = vsub.f32 %v438, %v475
      %v484 = vsub.f32 %v442, %v475
      %v485 = vsub.f32 %v446, %v475
      %v486 = vsub.f32 %v450, %v475
      %v487 = vsub.f32 %v454, %v475
      %v488 = vsub.f32 %v458, %v475
      %v489 = vsub.f32 %v462, %v475
      %v490 = vsub.f32 %v466, %v475
      %v491 = vsub.f32 %v470, %v475
      %492 = vset.pattern.permute.xlu0 2
      %493 = vperm.xlu0 %492, %v281
      %v494 = vpop.permute.xlu0 %493
      %496 = vset.pattern.permute.xlu0 2
      %497 = vperm.xlu0 %496, %v282
      %v498 = vpop.permute.xlu0 %497
      %500 = vset.pattern.permute.xlu0 2
      %501 = vperm.xlu0 %500, %v283
      %v502 = vpop.permute.xlu0 %501
      %504 = vset.pattern.permute.xlu0 2
      %505 = vperm.xlu0 %504, %v284
      %v506 = vpop.permute.xlu0 %505
      %508 = vset.pattern.permute.xlu0 2
      %509 = vperm.xlu0 %508, %v285
      %v510 = vpop.permute.xlu0 %509
      %512 = vset.pattern.permute.xlu0 2
      %513 = vperm.xlu0 %512, %v286
      %v514 = vpop.permute.xlu0 %513
      %516 = vset.pattern.permute.xlu0 2
      %517 = vperm.xlu0 %516, %v287
      %v518 = vpop.permute.xlu0 %517
      %520 = vset.pattern.permute.xlu0 2
      %521 = vperm.xlu0 %520, %v288
      %v522 = vpop.permute.xlu0 %521
      %524 = vset.pattern.permute.xlu0 2
      %525 = vperm.xlu0 %524, %v289
      %v526 = vpop.permute.xlu0 %525
      %528 = vset.pattern.permute.xlu0 2
      %529 = vperm.xlu0 %528, %v290
      %v530 = vpop.permute.xlu0 %529
      %532 = vset.pattern.permute.xlu0 2
      %533 = vperm.xlu0 %532, %v291
      %v534 = vpop.permute.xlu0 %533
      %536 = vset.pattern.permute.xlu0 2
      %537 = vperm.xlu0 %536, %v292
      %v538 = vpop.permute.xlu0 %537
      %540 = vset.pattern.permute.xlu0 2
      %541 = vperm.xlu0 %540, %v293
      %v542 = vpop.permute.xlu0 %541
      %544 = vset.pattern.permute.xlu0 2
      %545 = vperm.xlu0 %544, %v294
      %v546 = vpop.permute.xlu0 %545
      %548 = vset.pattern.permute.xlu0 2
      %549 = vperm.xlu0 %548, %v295
      %v550 = vpop.permute.xlu0 %549
      %552 = vset.pattern.permute.xlu0 2
      %553 = vperm.xlu0 %552, %v296
      %v554 = vpop.permute.xlu0 %553
      %v556 = vlaneseq
      %v557 = vshrl.u32 %v556, 7
      %v558 = vsub.s32 2, %v557
      %v559 = vrot.slane %v297, %v558
      %v560 = vsub.f32 %v494, %v559
      %v561 = vsub.f32 %v498, %v559
      %v562 = vsub.f32 %v502, %v559
      %v563 = vsub.f32 %v506, %v559
      %v564 = vsub.f32 %v510, %v559
      %v565 = vsub.f32 %v514, %v559
      %v566 = vsub.f32 %v518, %v559
      %v567 = vsub.f32 %v522, %v559
      %v568 = vsub.f32 %v526, %v559
      %v569 = vsub.f32 %v530, %v559
      %v570 = vsub.f32 %v534, %v559
      %v571 = vsub.f32 %v538, %v559
      %v572 = vsub.f32 %v542, %v559
      %v573 = vsub.f32 %v546, %v559
      %v574 = vsub.f32 %v550, %v559
      %v575 = vsub.f32 %v554, %v559
      %v576 = vmul.f32 %v392, %v392
      %v577 = vmul.f32 %v393, %v393
      %v578 = vmul.f32 %v394, %v394
      %v579 = vmul.f32 %v395, %v395
      %v580 = vmul.f32 %v396, %v396
      %v581 = vmul.f32 %v397, %v397
      %v582 = vmul.f32 %v398, %v398
      %v583 = vmul.f32 %v399, %v399
      %v584 = vmul.f32 %v400, %v400
      %v585 = vmul.f32 %v401, %v401
      %v586 = vmul.f32 %v402, %v402
      %v587 = vmul.f32 %v403, %v403
      %v588 = vmul.f32 %v404, %v404
      %v589 = vmul.f32 %v405, %v405
      %v590 = vmul.f32 %v406, %v406
      %v591 = vmul.f32 %v407, %v407
      %v592 = vmul.f32 %v476, %v476
      %v593 = vmul.f32 %v477, %v477
      %v594 = vmul.f32 %v478, %v478
      %v595 = vmul.f32 %v479, %v479
      %v596 = vmul.f32 %v480, %v480
      %v597 = vmul.f32 %v481, %v481
      %v598 = vmul.f32 %v482, %v482
      %v599 = vmul.f32 %v483, %v483
      %v600 = vmul.f32 %v484, %v484
      %v601 = vmul.f32 %v485, %v485
      %v602 = vmul.f32 %v486, %v486
      %v603 = vmul.f32 %v487, %v487
      %v604 = vmul.f32 %v488, %v488
      %v605 = vmul.f32 %v489, %v489
      %v606 = vmul.f32 %v490, %v490
      %v607 = vmul.f32 %v491, %v491
      %v608 = vadd.f32 %v576, %v592
      %v609 = vadd.f32 %v577, %v593
      %v610 = vadd.f32 %v578, %v594
      %v611 = vadd.f32 %v579, %v595
      %v612 = vadd.f32 %v580, %v596
      %v613 = vadd.f32 %v581, %v597
      %v614 = vadd.f32 %v582, %v598
      %v615 = vadd.f32 %v583, %v599
      %v616 = vadd.f32 %v584, %v600
      %v617 = vadd.f32 %v585, %v601
      %v618 = vadd.f32 %v586, %v602
      %v619 = vadd.f32 %v587, %v603
      %v620 = vadd.f32 %v588, %v604
      %v621 = vadd.f32 %v589, %v605
      %v622 = vadd.f32 %v590, %v606
      %v623 = vadd.f32 %v591, %v607
      %v624 = vmul.f32 %v560, %v560
      %v625 = vmul.f32 %v561, %v561
      %v626 = vmul.f32 %v562, %v562
      %v627 = vmul.f32 %v563, %v563
      %v628 = vmul.f32 %v564, %v564
      %v629 = vmul.f32 %v565, %v565
      %v630 = vmul.f32 %v566, %v566
      %v631 = vmul.f32 %v567, %v567
      %v632 = vmul.f32 %v568, %v568
      %v633 = vmul.f32 %v569, %v569
      %v634 = vmul.f32 %v570, %v570
      %v635 = vmul.f32 %v571, %v571
      %v636 = vmul.f32 %v572, %v572
      %v637 = vmul.f32 %v573, %v573
      %v638 = vmul.f32 %v574, %v574
      %v639 = vmul.f32 %v575, %v575
      %v640 = vadd.f32 %v608, %v624
      %v641 = vadd.f32 %v609, %v625
      %v642 = vadd.f32 %v610, %v626
      %v643 = vadd.f32 %v611, %v627
      %v644 = vadd.f32 %v612, %v628
      %v645 = vadd.f32 %v613, %v629
      %v646 = vadd.f32 %v614, %v630
      %v647 = vadd.f32 %v615, %v631
      %v648 = vadd.f32 %v616, %v632
      %v649 = vadd.f32 %v617, %v633
      %v650 = vadd.f32 %v618, %v634
      %v651 = vadd.f32 %v619, %v635
      %v652 = vadd.f32 %v620, %v636
      %v653 = vadd.f32 %v621, %v637
      %v654 = vadd.f32 %v622, %v638
      %v655 = vadd.f32 %v623, %v639
      %v656 = vlaneseq
      %v657 = vshrl.u32 %v656, 7
      %v658 = vadd.s32 %v657, 8
      %v659 = vadd.s32 %v657, 16
      %v660 = vadd.s32 %v657, 24
      %v661 = vadd.s32 %v657, 32
      %v662 = vadd.s32 %v657, 40
      %v663 = vadd.s32 %v657, 48
      %v664 = vadd.s32 %v657, 56
      %v665 = vadd.s32 %v657, 64
      %v666 = vadd.s32 %v657, 72
      %v667 = vadd.s32 %v657, 80
      %v668 = vadd.s32 %v657, 88
      %v669 = vadd.s32 %v657, 96
      %v670 = vadd.s32 %v657, 104
      %v671 = vadd.s32 %v657, 112
      %v672 = vadd.s32 %v657, 120
      %673 = vmin.xlane.f32.xlu0 %v640
      %v674 = vpop.xlane.xlu0 %673
      %675 = vmin.xlane.f32.xlu0 %v641
      %v676 = vpop.xlane.xlu0 %675
      %677 = vmin.xlane.f32.xlu0 %v642
      %v678 = vpop.xlane.xlu0 %677
      %679 = vmin.xlane.f32.xlu0 %v643
      %v680 = vpop.xlane.xlu0 %679
      %681 = vmin.xlane.f32.xlu0 %v644
      %v682 = vpop.xlane.xlu0 %681
      %683 = vmin.xlane.f32.xlu0 %v645
      %v684 = vpop.xlane.xlu0 %683
      %685 = vmin.xlane.f32.xlu0 %v646
      %v686 = vpop.xlane.xlu0 %685
      %687 = vmin.xlane.f32.xlu0 %v647
      %v688 = vpop.xlane.xlu0 %687
      %689 = vmin.xlane.f32.xlu0 %v648
      %v690 = vpop.xlane.xlu0 %689
      %691 = vmin.xlane.f32.xlu0 %v649
      %v692 = vpop.xlane.xlu0 %691
      %693 = vmin.xlane.f32.xlu0 %v650
      %v694 = vpop.xlane.xlu0 %693
      %695 = vmin.xlane.f32.xlu0 %v651
      %v696 = vpop.xlane.xlu0 %695
      %697 = vmin.xlane.f32.xlu0 %v652
      %v698 = vpop.xlane.xlu0 %697
      %699 = vmin.xlane.f32.xlu0 %v653
      %v700 = vpop.xlane.xlu0 %699
      %701 = vmin.xlane.f32.xlu0 %v654
      %v702 = vpop.xlane.xlu0 %701
      %703 = vmin.xlane.f32.xlu0 %v655
      %v704 = vpop.xlane.xlu0 %703
      %s705 = smul.u32 %s21, 128
      %v706 = vstv %s705
      %v707 = vadd.s32 %v657, %v706
      %v708 = vadd.s32 %v658, %v706
      %v709 = vadd.s32 %v659, %v706
      %v710 = vadd.s32 %v660, %v706
      %v711 = vadd.s32 %v661, %v706
      %v712 = vadd.s32 %v662, %v706
      %v713 = vadd.s32 %v663, %v706
      %v714 = vadd.s32 %v664, %v706
      %v715 = vadd.s32 %v665, %v706
      %v716 = vadd.s32 %v666, %v706
      %v717 = vadd.s32 %v667, %v706
      %v718 = vadd.s32 %v668, %v706
      %v719 = vadd.s32 %v669, %v706
      %v720 = vadd.s32 %v670, %v706
      %v721 = vadd.s32 %v671, %v706
      %v722 = vadd.s32 %v672, %v706
      %vm723 = vcmp.lt.s32.totalorder %v707, 200
      %vm724 = vcmp.lt.s32.totalorder %v708, 200
      %vm725 = vcmp.lt.s32.totalorder %v709, 200
      %vm726 = vcmp.lt.s32.totalorder %v710, 200
      %vm727 = vcmp.lt.s32.totalorder %v711, 200
      %vm728 = vcmp.lt.s32.totalorder %v712, 200
      %vm729 = vcmp.lt.s32.totalorder %v713, 200
      %vm730 = vcmp.lt.s32.totalorder %v714, 200
      %vm731 = vcmp.lt.s32.totalorder %v715, 200
      %vm732 = vcmp.lt.s32.totalorder %v716, 200
      %vm733 = vcmp.lt.s32.totalorder %v717, 200
      %vm734 = vcmp.lt.s32.totalorder %v718, 200
      %vm735 = vcmp.lt.s32.totalorder %v719, 200
      %vm736 = vcmp.lt.s32.totalorder %v720, 200
      %vm737 = vcmp.lt.s32.totalorder %v721, 200
      %vm738 = vcmp.lt.s32.totalorder %v722, 200
      %v739 = vsel %vm723, %v674, 0.0
      %v740 = vsel %vm724, %v676, 0.0
      %v741 = vsel %vm725, %v678, 0.0
      %v742 = vsel %vm726, %v680, 0.0
      %v743 = vsel %vm727, %v682, 0.0
      %v744 = vsel %vm728, %v684, 0.0
      %v745 = vsel %vm729, %v686, 0.0
      %v746 = vsel %vm730, %v688, 0.0
      %v747 = vsel %vm731, %v690, 0.0
      %v748 = vsel %vm732, %v692, 0.0
      %v749 = vsel %vm733, %v694, 0.0
      %v750 = vsel %vm734, %v696, 0.0
      %v751 = vsel %vm735, %v698, 0.0
      %v752 = vsel %vm736, %v700, 0.0
      %v753 = vsel %vm737, %v702, 0.0
      %v754 = vsel %vm738, %v704, 0.0
      %v755 = vadd.f32 %v739, %v740
      %v756 = vadd.f32 %v755, %v741
      %v757 = vadd.f32 %v756, %v742
      %v758 = vadd.f32 %v757, %v743
      %v759 = vadd.f32 %v758, %v744
      %v760 = vadd.f32 %v759, %v745
      %v761 = vadd.f32 %v760, %v746
      %v762 = vadd.f32 %v761, %v747
      %v763 = vadd.f32 %v762, %v748
      %v764 = vadd.f32 %v763, %v749
      %v765 = vadd.f32 %v764, %v750
      %v766 = vadd.f32 %v765, %v751
      %v767 = vadd.f32 %v766, %v752
      %v768 = vadd.f32 %v767, %v753
      %v769 = vadd.f32 %v768, %v754
      %v770 = vrot.slane %v769, 4
      %v771 = vadd.f32 %v769, %v770
      %v772 = vrot.slane %v771, 2
      %v773 = vadd.f32 %v771, %v772
      %v774 = vrot.slane %v773, 1
      %v775 = vadd.f32 %v773, %v774
      %v776 = vld [vmem:[%s276] sm:$0x1]
      %vm777 = vcmp.eq.s32.totalorder %v300, 0
      %v778 = vsel %vm777, %v775, 0.0
      %v779 = vadd.f32 %v776, %v778
      %780 = vst [vmem:[%s276] sm:$0x1] %v779
      %v781 = vmin.f32 %v640, %v644
      %v782 = vmin.f32 %v641, %v645
      %v783 = vmin.f32 %v642, %v646
      %v784 = vmin.f32 %v643, %v647
      %v785 = vmin.f32 %v781, %v648
      %v786 = vmin.f32 %v782, %v649
      %v787 = vmin.f32 %v783, %v650
      %v788 = vmin.f32 %v784, %v651
      %v789 = vmin.f32 %v785, %v652
      %v790 = vmin.f32 %v786, %v653
      %v791 = vmin.f32 %v787, %v654
      %v792 = vmin.f32 %v788, %v655
      %v793 = vmin.f32 %v789, %v790
      %v794 = vmin.f32 %v791, %v792
      %v795 = vmin.f32 %v793, %v794
      %v796 = vrot.slane %v795, 4
      %v797 = vmin.f32 %v795, %v796
      %v798 = vrot.slane %v797, 2
      %v799 = vmin.f32 %v797, %v798
      %v800 = vrot.slane %v799, 1
      %v801 = vmin.f32 %v799, %v800
      %vm802 = vcmp.le.f32.partialorder %v640, %v801
      %vm803 = vcmp.le.f32.partialorder %v641, %v801
      %vm804 = vcmp.le.f32.partialorder %v642, %v801
      %vm805 = vcmp.le.f32.partialorder %v643, %v801
      %vm806 = vcmp.le.f32.partialorder %v644, %v801
      %vm807 = vcmp.le.f32.partialorder %v645, %v801
      %vm808 = vcmp.le.f32.partialorder %v646, %v801
      %vm809 = vcmp.le.f32.partialorder %v647, %v801
      %vm810 = vcmp.le.f32.partialorder %v648, %v801
      %vm811 = vcmp.le.f32.partialorder %v649, %v801
      %vm812 = vcmp.le.f32.partialorder %v650, %v801
      %vm813 = vcmp.le.f32.partialorder %v651, %v801
      %vm814 = vcmp.le.f32.partialorder %v652, %v801
      %vm815 = vcmp.le.f32.partialorder %v653, %v801
      %vm816 = vcmp.le.f32.partialorder %v654, %v801
      %vm817 = vcmp.le.f32.partialorder %v655, %v801
      %v818 = vsel %vm802, %v657, 128
      %v819 = vsel %vm803, %v658, 128
      %v820 = vsel %vm804, %v659, 128
      %v821 = vsel %vm805, %v660, 128
      %v822 = vsel %vm806, %v661, 128
      %v823 = vsel %vm807, %v662, 128
      %v824 = vsel %vm808, %v663, 128
      %v825 = vsel %vm809, %v664, 128
      %v826 = vsel %vm810, %v665, 128
      %v827 = vsel %vm811, %v666, 128
      %v828 = vsel %vm812, %v667, 128
      %v829 = vsel %vm813, %v668, 128
      %v830 = vsel %vm814, %v669, 128
      %v831 = vsel %vm815, %v670, 128
      %v832 = vsel %vm816, %v671, 128
      %v833 = vsel %vm817, %v672, 128
      %vm834 = vcmp.lt.s32.totalorder %v818, %v822
      %v835 = vsel %vm834, %v818, %v822
      %vm836 = vcmp.lt.s32.totalorder %v819, %v823
      %v837 = vsel %vm836, %v819, %v823
      %vm838 = vcmp.lt.s32.totalorder %v820, %v824
      %v839 = vsel %vm838, %v820, %v824
      %vm840 = vcmp.lt.s32.totalorder %v821, %v825
      %v841 = vsel %vm840, %v821, %v825
      %vm842 = vcmp.lt.s32.totalorder %v835, %v826
      %v843 = vsel %vm842, %v835, %v826
      %vm844 = vcmp.lt.s32.totalorder %v837, %v827
      %v845 = vsel %vm844, %v837, %v827
      %vm846 = vcmp.lt.s32.totalorder %v839, %v828
      %v847 = vsel %vm846, %v839, %v828
      %vm848 = vcmp.lt.s32.totalorder %v841, %v829
      %v849 = vsel %vm848, %v841, %v829
      %vm850 = vcmp.lt.s32.totalorder %v843, %v830
      %v851 = vsel %vm850, %v843, %v830
      %vm852 = vcmp.lt.s32.totalorder %v845, %v831
      %v853 = vsel %vm852, %v845, %v831
      %vm854 = vcmp.lt.s32.totalorder %v847, %v832
      %v855 = vsel %vm854, %v847, %v832
      %vm856 = vcmp.lt.s32.totalorder %v849, %v833
      %v857 = vsel %vm856, %v849, %v833
      %vm858 = vcmp.lt.s32.totalorder %v851, %v853
      %v859 = vsel %vm858, %v851, %v853
      %vm860 = vcmp.lt.s32.totalorder %v855, %v857
      %v861 = vsel %vm860, %v855, %v857
      %vm862 = vcmp.lt.s32.totalorder %v859, %v861
      %v863 = vsel %vm862, %v859, %v861
      %v864 = vrot.slane %v863, 4
      %vm865 = vcmp.lt.s32.totalorder %v863, %v864
      %v866 = vsel %vm865, %v863, %v864
      %v867 = vrot.slane %v866, 2
      %vm868 = vcmp.lt.s32.totalorder %v866, %v867
      %v869 = vsel %vm868, %v866, %v867
      %v870 = vrot.slane %v869, 1
      %vm871 = vcmp.lt.s32.totalorder %v869, %v870
      %v872 = vsel %vm871, %v869, %v870
      %vm873 = vcmp.eq.s32.totalorder %v657, %v872
      %vm874 = vcmp.eq.s32.totalorder %v658, %v872
      %vm875 = vcmp.eq.s32.totalorder %v659, %v872
      %vm876 = vcmp.eq.s32.totalorder %v660, %v872
      %vm877 = vcmp.eq.s32.totalorder %v661, %v872
      %vm878 = vcmp.eq.s32.totalorder %v662, %v872
      %vm879 = vcmp.eq.s32.totalorder %v663, %v872
      %vm880 = vcmp.eq.s32.totalorder %v664, %v872
      %vm881 = vcmp.eq.s32.totalorder %v665, %v872
      %vm882 = vcmp.eq.s32.totalorder %v666, %v872
      %vm883 = vcmp.eq.s32.totalorder %v667, %v872
      %vm884 = vcmp.eq.s32.totalorder %v668, %v872
      %vm885 = vcmp.eq.s32.totalorder %v669, %v872
      %vm886 = vcmp.eq.s32.totalorder %v670, %v872
      %vm887 = vcmp.eq.s32.totalorder %v671, %v872
      %vm888 = vcmp.eq.s32.totalorder %v672, %v872
      %v889 = vsel %vm873, 1, 0
      %v890 = vsel %vm874, 1, 0
      %v891 = vsel %vm875, 1, 0
      %v892 = vsel %vm876, 1, 0
      %v893 = vsel %vm877, 1, 0
      %v894 = vsel %vm878, 1, 0
      %v895 = vsel %vm879, 1, 0
      %v896 = vsel %vm880, 1, 0
      %v897 = vsel %vm881, 1, 0
      %v898 = vsel %vm882, 1, 0
      %v899 = vsel %vm883, 1, 0
      %v900 = vsel %vm884, 1, 0
      %v901 = vsel %vm885, 1, 0
      %v902 = vsel %vm886, 1, 0
      %v903 = vsel %vm887, 1, 0
      %v904 = vsel %vm888, 1, 0
      %v905 = vcvt.s32.f32 %v889
      %v906 = vcvt.s32.f32 %v890
      %v907 = vcvt.s32.f32 %v891
      %v908 = vcvt.s32.f32 %v892
      %v909 = vcvt.s32.f32 %v893
      %v910 = vcvt.s32.f32 %v894
      %v911 = vcvt.s32.f32 %v895
      %v912 = vcvt.s32.f32 %v896
      %v913 = vcvt.s32.f32 %v897
      %v914 = vcvt.s32.f32 %v898
      %v915 = vcvt.s32.f32 %v899
      %v916 = vcvt.s32.f32 %v900
      %v917 = vcvt.s32.f32 %v901
      %v918 = vcvt.s32.f32 %v902
      %v919 = vcvt.s32.f32 %v903
      %v920 = vcvt.s32.f32 %v904
      %921 = vmatprep.subr.mxu0 0.0
      %922 = vmatpush1.msra.mxu0 %v920
      %923 = vmatprep.subr.mxu0 0.0
      %924 = vmatpush1.msra.mxu0 %v919
      %925 = vmatprep.subr.mxu0 0.0
      %926 = vmatpush1.msra.mxu0 %v918
      %927 = vmatprep.subr.mxu0 0.0
      %928 = vmatpush1.msra.mxu0 %v917
      %929 = vmatprep.subr.mxu0 0.0
      %930 = vmatpush1.msra.mxu0 %v916
      %931 = vmatprep.subr.mxu0 0.0
      %932 = vmatpush1.msra.mxu0 %v915
      %933 = vmatprep.subr.mxu0 0.0
      %934 = vmatpush1.msra.mxu0 %v914
      %935 = vmatprep.subr.mxu0 0.0
      %936 = vmatpush1.msra.mxu0 %v913
      %937 = vmatprep.subr.mxu0 0.0
      %938 = vmatpush1.msra.mxu0 %v912
      %939 = vmatprep.subr.mxu0 0.0
      %940 = vmatpush1.msra.mxu0 %v911
      %941 = vmatprep.subr.mxu0 0.0
      %942 = vmatpush1.msra.mxu0 %v910
      %943 = vmatprep.subr.mxu0 0.0
      %944 = vmatpush1.msra.mxu0 %v909
      %945 = vmatprep.subr.mxu0 0.0
      %946 = vmatpush1.msra.mxu0 %v908
      %947 = vmatprep.subr.mxu0 0.0
      %948 = vmatpush1.msra.mxu0 %v907
      %949 = vmatprep.subr.mxu0 0.0
      %950 = vmatpush1.msra.mxu0 %v906
      %951 = vmatprep.subr.mxu0 0.0
      %952 = vmatpush1.msra.mxu0 %v905
      %953 = vmatprep.subr.mxu0 0.0
      %954 = vmatpush2.msra.mxu0 0.0
      %955 = vmatprep.subr.mxu0 0.0
      %956 = vmatpush2.msra.mxu0 0.0
      %957 = vmatprep.subr.mxu0 0.0
      %958 = vmatpush2.msra.mxu0 0.0
      %959 = vmatprep.subr.mxu0 0.0
      %960 = vmatpush2.msra.mxu0 0.0
      %961 = vmatprep.subr.mxu0 0.0
      %962 = vmatpush2.msra.mxu0 0.0
      %963 = vmatprep.subr.mxu0 0.0
      %964 = vmatpush2.msra.mxu0 0.0
      %965 = vmatprep.subr.mxu0 0.0
      %966 = vmatpush2.msra.mxu0 0.0
      %967 = vmatprep.subr.mxu0 0.0
      %968 = vmatpush2.msra.mxu0 0.0
      %969 = vmatprep.subr.mxu0 0.0
      %970 = vmatpush2.msra.mxu0 0.0
      %971 = vmatprep.subr.mxu0 0.0
      %972 = vmatpush2.msra.mxu0 0.0
      %973 = vmatprep.subr.mxu0 0.0
      %974 = vmatpush2.msra.mxu0 0.0
      %975 = vmatprep.subr.mxu0 0.0
      %976 = vmatpush2.msra.mxu0 0.0
      %977 = vmatprep.subr.mxu0 0.0
      %978 = vmatpush2.msra.mxu0 0.0
      %979 = vmatprep.subr.mxu0 0.0
      %980 = vmatpush2.msra.mxu0 0.0
      %981 = vmatprep.subr.mxu0 0.0
      %982 = vmatpush2.msra.mxu0 0.0
      %983 = vmatprep.subr.mxu0 0.0
      %984 = vmatpush2.msra.mxu0 0.0
      %985 = vmatprep.mubr.f32.mxu0 0.0
      %986 = vmatmul.mubr.f32.gmra.mxu0 %v298
      %v987 = vpop.f32.mrf.mxu0
      %v988 = vadd.f32 0.0, %v987
      %v989 = vpop.f32.mrf.mxu0
      %990 = vdwg.mxu0
      %v991 = vld [vmem:[#allocation2] sm:$0x1]
      %vm992 = vcmp.lt.f32.partialorder %v801, %v991
      %v993 = vsel %vm992, %v801, %v991
      %994 = vst [vmem:[#allocation2] sm:$0x1] %v993
      %v995 = vld [vmem:[%s280] sm:$0x7]
      %v996 = vsel %vm992, 1, 0
      %v997 = vlaneseq
      %v998 = vshrl.u32 %v997, 7
      %v999 = vsub.s32 0, %v998
      %v1000 = vrot.slane %v996, %v999
      %vm1001 = vcmp.eq.s32.totalorder %v1000, 1
      %v1002 = vsel %vm1001, %v988, %v995
      %1003 = vst [vmem:[%s280] sm:$0x7] %v1002
      %p1004 = scmp.eq.s32.totalorder %s21, 1
      // Predicated region
      $region37: #{p2mpp_loss.1} parent=31 // pred_check
        %p1005 = pneg %p1004
      $region38: #{p2mpp_loss.1} parent=31 // pred_check_branch
        %1007 = sbr.rel (%p1005) target = $region40
      $region39: #{p2mpp_loss.1} parent=31 // pred_region
        %vm1008 = vcmp.lt.s32.totalorder %v300, 48
        %v1009 = vld [vmem:[#allocation2] sm:$0x1]
        %v1010 = vsel %vm1008, %v1009, 0.0
        %vm1011 = vcmask 1040384
        %v1012 = vsel %vm1011, %v1010, 0.0
        %1013 = vadd.xlane.f32.xlu0 %v1012
        %v1014 = vpop.xlane.xlu0 %1013
        %v1015 = vld [vmem:[%s276] sm:$0x1]
        %vm1016 = vcmp.eq.s32.totalorder %v300, 1
        %v1017 = vsel %vm1016, %v1014, 0.0
        %v1018 = vadd.f32 %v1015, %v1017
        %1019 = vst [vmem:[%s276] sm:$0x1] %v1018
      $region40: #{p2mpp_loss.1} parent=31 // pred_fallthru
        _
      %p1020 = scmp.lt.s32.totalorder %s20, 1
      %s1021 = scalar_select %p1020, %s20, 1
      %s1022 = scalar_lea.vmem %s3, %s1021
      %p1023 = scmp.lt.s32.totalorder %s20, 1
      %s1024 = scalar_select %p1023, %s20, 1
      %s1025 = smul.addr %s1024, 4
      %s1026 = scalar_lea.vmem %s4, %s1025
      // Predicated region
      $region41: #{p2mpp_loss.1} parent=31 // pred_check
        %p1027 = pneg %p128
      $region42: #{p2mpp_loss.1} parent=31 // pred_check_branch
        %1029 = sbr.rel (%p1027) target = $region44
      $region43: #{p2mpp_loss.1} parent=31 // pred_region
        _
      $region44: #{p2mpp_loss.1} parent=31 // pred_fallthru
        _
      // Predicated region
      $region45: #{p2mpp_loss.1} parent=31 // pred_check
        %p1030 = pneg %p154
      $region46: #{p2mpp_loss.1} parent=31 // pred_check_branch
        %1032 = sbr.rel (%p1030) target = $region48
      $region47: #{p2mpp_loss.1} parent=31 // pred_region
        _
      $region48: #{p2mpp_loss.1} parent=31 // pred_fallthru
        _
    $region32: #{p2mpp_loss.1} parent=5 // pred_fallthru
      _
    %p1033 = scmp.le.s32.totalorder 2, %s11
    // Predicated region
    $region49: #{p2mpp_loss.1} parent=5 // pred_check
      %p1034 = pneg %p1033
    $region50: #{p2mpp_loss.1} parent=5 // pred_check_branch
      %1036 = sbr.rel (%p1034) target = $region52
    $region51: #{p2mpp_loss.1} parent=5 // pred_region
      %s1037 = ssub.s32 %s11, 2
      // Predicated region
      $region53: #{p2mpp_loss.1} parent=51 // pred_check
        %p1038 = pneg %p134
      $region54: #{p2mpp_loss.1} parent=51 // pred_check_branch
        %1040 = sbr.rel (%p1038) target = $region56
      $region55: #{p2mpp_loss.1} parent=51 // pred_region
        %p1041 = scmp.lt.s32.totalorder %s22, 1
        %s1042 = scalar_select %p1041, %s22, 1
        %s1043 = scalar_lea.vmem %s3, %s1042
      $region56: #{p2mpp_loss.1} parent=51 // pred_fallthru
        _
      // Predicated region
      $region57: #{p2mpp_loss.1} parent=51 // pred_check
        %p1044 = pneg %p160
      $region58: #{p2mpp_loss.1} parent=51 // pred_check_branch
        %1046 = sbr.rel (%p1044) target = $region60
      $region59: #{p2mpp_loss.1} parent=51 // pred_region
        %p1047 = scmp.lt.s32.totalorder %s22, 1
        %s1048 = scalar_select %p1047, %s22, 1
        %s1049 = smul.addr %s1048, 4
        %s1050 = scalar_lea.vmem %s4, %s1049
      $region60: #{p2mpp_loss.1} parent=51 // pred_fallthru
        _
    $region52: #{p2mpp_loss.1} parent=5 // pred_fallthru
      _
  $region6: #{p2mpp_loss.1} parent=0 // loop_footer
    %s15 = sadd.s32 1, %s11
  $region7: #{p2mpp_loss.1} parent=0 // loop_footer_branch
    %10 = sbr.rel target = $region3
  $region8: #{p2mpp_loss.1} parent=0 // loop_exit
    _

</llo_original>
